<compile_context>
chip_gen: v5e
topology: v5e:2x2
jax: 0.10.0
libtpu: 0.0.40
codegen_flags: <defaults>
</compile_context>

<pallas_src>
import math

import jax
import jax.numpy as jnp
from jax.experimental import pallas as pl


def _qesm_kernel(gf_ref, lf_ref,
                 ws_g, bs_g, wv_g, bv_g, mh_g, wo_g, bo_g,
                 ws_l, bs_l, wv_l, bv_l, mh_l, wo_l, bo_l,
                 ws_c, bs_c, wv_c, bv_c, mh_c, wo_c, bo_c,
                 out_ref):
    B, T, _ = gf_ref.shape

    def attend(kv, ws_ref, bs_ref, wv_ref, bv_ref, mh_ref, wo_ref, bo_ref):
        """Cross-attention with a pre-projected, pre-scaled learnable query.

        kv: (B, T, D) values.  Returns the per-batch output row (B, D); the
        reference produces this same row for every one of the T positions.
        """
        D = kv.shape[-1]
        H = mh_ref.shape[0]

        # Per-head scores <q_h, k_{t,h}>: query, Wq, 1/sqrt(hd) and Wk are all
        # folded into w_score (D, H) on the host -> one tiny matmul.
        w_s = jnp.broadcast_to(ws_ref[...], (B, D, H))
        scores = jnp.einsum('btd,bdh->bth', kv, w_s,
                            preferred_element_type=jnp.float32) + bs_ref[...]

        # Softmax over the T (key) axis, one weight row per (batch, head).
        m = jnp.max(scores, axis=1, keepdims=True)
        e = jnp.exp(scores - m)
        denom = jnp.sum(e, axis=1, keepdims=True)
        p = e * pl.reciprocal(denom, approx=True)                         # (B, T, H)

        # Value projection (the only full D x D projection left in-kernel).
        w_v = jnp.broadcast_to(wv_ref[...], (B, D, D))
        v = jnp.einsum('btd,bde->bte', kv, w_v,
                       preferred_element_type=jnp.float32) + bv_ref[...]  # (B, T, D)

        # Expand head weights to feature lanes via the head-membership mask and
        # reduce over T: attn[b, d] = sum_t p[b, t, head(d)] * v[b, t, d].
        mask = jnp.broadcast_to(mh_ref[...], (B, H, D))
        p_full = jnp.einsum('bth,bhd->btd', p, mask,
                            preferred_element_type=jnp.float32)           # (B, T, D)
        attn = jnp.sum(p_full * v, axis=1)                                # (B, D)

        # Output projection.
        return jnp.dot(attn, wo_ref[...],
                       preferred_element_type=jnp.float32) + bo_ref[...]  # (B, D)

    gf = gf_ref[...].astype(jnp.float32)
    lf = lf_ref[...].astype(jnp.float32)

    agg_g = attend(gf, ws_g, bs_g, wv_g, bv_g, mh_g, wo_g, bo_g)   # (B, Dg)
    agg_l = attend(lf, ws_l, bs_l, wv_l, bv_l, mh_l, wo_l, bo_l)   # (B, Dl)

    # Concatenated features are identical for every position t; broadcast the
    # single row to (B, T, Dc) and run the third cross-attention unchanged.
    cat = jnp.concatenate([agg_g, agg_l], axis=-1)                  # (B, Dc)
    kv_c = jnp.broadcast_to(cat[:, None, :], (B, T, cat.shape[-1]))
    agg_c = attend(kv_c, ws_c, bs_c, wv_c, bv_c, mh_c, wo_c, bo_c)  # (B, Dc)

    # Lane-dense store: T copies of the row along the last axis -> (B, T*Dc).
    out_ref[...] = jnp.concatenate([agg_c] * T, axis=-1).astype(out_ref.dtype)


def init_attn_params(key, D):
    """Synthetic parameters with the same shapes as CrossAttentionWithLearnableQuery:
    query (1,1,D), in_proj_weight (3D,D), in_proj_bias (3D,), out_proj (D,D)+(D,)."""
    k_q, k_w, k_b, k_ow, k_ob = jax.random.split(key, 5)
    bound = 1.0 / math.sqrt(D)
    return dict(
        query=jax.random.normal(k_q, (1, 1, D), jnp.float32),
        in_proj_w=jax.random.uniform(k_w, (3 * D, D), jnp.float32, -bound, bound),
        in_proj_b=jax.random.normal(k_b, (3 * D,), jnp.float32) * 0.1,
        out_w=jax.random.uniform(k_ow, (D, D), jnp.float32, -bound, bound),
        out_b=jax.random.normal(k_ob, (D,), jnp.float32) * 0.1,
    )


def fold_attn_params(params, num_heads):
    """Host-side, parameter-only preprocessing (no activation math).

    Folds query -> Wq -> 1/sqrt(hd) -> Wk into one (D, H) score weight so the
    kernel needs a single tiny matmul for scores instead of Q & K projections
    plus an H-way unrolled head loop.
    """
    query = params["query"].reshape(-1)                     # (D,)
    D = query.shape[0]
    H = num_heads
    hd = D // H
    w, b = params["in_proj_w"], params["in_proj_b"]
    wq, wk, wv = w[:D], w[D:2 * D], w[2 * D:]
    bq, bk, bv = b[:D], b[D:2 * D], b[2 * D:]

    q_proj = (query @ wq.T + bq) * (1.0 / math.sqrt(hd))    # scaled projected query
    onehot = (jnp.arange(D)[:, None] // hd
              == jnp.arange(H)[None, :]).astype(jnp.float32)   # (D, H) head membership
    w_score = wk.T @ (q_proj[:, None] * onehot)             # (D, H)
    b_score = (bk * q_proj) @ onehot                        # (H,)

    return (
        w_score,                                            # (D, H)
        b_score.reshape(1, 1, H),                           # (1, 1, H)
        wv.T,                                               # (D, D): V = kv @ wv.T + bv
        bv.reshape(1, 1, D),                                # (1, 1, D)
        onehot.T,                                           # (H, D) head mask
        params["out_w"].T,                                  # (D, D)
        params["out_b"].reshape(1, D),                      # (1, D)
    )


def query_enhanced_semantic_module(global_features, local_features,
                                   params_global, params_local, params_concat,
                                   num_heads=8):
    """global_features (B,T,Dg), local_features (B,T,Dl) -> (B,T,Dg+Dl).
    Matches QueryEnhancedSemanticModule.forward (batch-first in/out)."""
    B, T, Dg = global_features.shape
    Dl = local_features.shape[-1]
    Dc = Dg + Dl

    fg = fold_attn_params(params_global, num_heads)
    fl = fold_attn_params(params_local, num_heads)
    fc = fold_attn_params(params_concat, num_heads)

    out_flat = pl.pallas_call(
        _qesm_kernel,
        out_shape=jax.ShapeDtypeStruct((B, T * Dc), global_features.dtype),
    )(global_features, local_features, *fg, *fl, *fc)
    return out_flat.reshape(B, T, Dc)


# ----------------------- pure-JAX reference (for self-check) -----------------------

def _reference_cross_attention(kv, params, num_heads):
    B, T, D = kv.shape
    H, hd = num_heads, D // num_heads
    query = params["query"].reshape(D)
    w, bias = params["in_proj_w"], params["in_proj_b"]
    wq, wk, wv = w[:D], w[D:2 * D], w[2 * D:]
    bq, bk, bv = bias[:D], bias[D:2 * D], bias[2 * D:]
    q = (query @ wq.T + bq) / math.sqrt(hd)
    k = kv @ wk.T + bk
    v = kv @ wv.T + bv
    scores = jnp.einsum('hd,bthd->bht', q.reshape(H, hd), k.reshape(B, T, H, hd))
    p = jax.nn.softmax(scores, axis=-1)
    attn = jnp.einsum('bht,bthd->bhd', p, v.reshape(B, T, H, hd)).reshape(B, D)
    out = attn @ params["out_w"].T + params["out_b"]
    return jnp.broadcast_to(out[:, None, :], (B, T, D))


def _reference_module(gf, lf, pg, plo, pc, num_heads):
    ag = _reference_cross_attention(gf, pg, num_heads)
    al = _reference_cross_attention(lf, plo, num_heads)
    cat = jnp.concatenate([ag, al], axis=-1)
    return _reference_cross_attention(cat, pc, num_heads)


if __name__ == "__main__":
    B, T = 2, 8
    global_dim, local_dim, num_heads = 32, 32, 8

    key = jax.random.PRNGKey(0)
    k_g, k_l, k_pg, k_pl, k_pc = jax.random.split(key, 5)

    global_features = jax.random.normal(k_g, (B, T, global_dim), jnp.float32)
    local_features = jax.random.normal(k_l, (B, T, local_dim), jnp.float32)

    params_global = init_attn_params(k_pg, global_dim)
    params_local = init_attn_params(k_pl, local_dim)
    params_concat = init_attn_params(k_pc, global_dim + local_dim)

    out = query_enhanced_semantic_module(global_features, local_features,
                                         params_global, params_local, params_concat,
                                         num_heads=num_heads)
    jax.block_until_ready(out)
    assert out.shape == (B, T, global_dim + local_dim)

    ref = _reference_module(global_features, local_features,
                            params_global, params_local, params_concat, num_heads)
    assert jnp.allclose(out, ref, rtol=5e-2, atol=5e-2), \
        "Pallas output does not match the pure-JAX reference"
    print("KERNEL_OK")
</pallas_src>

<mosaic_0001>
module attributes {stable_mosaic.version = 11 : i64} {
  func.func @_qesm_kernel(%arg0: memref<2x8x32xf32, #tpu.memory_space<vmem>>, %arg1: memref<2x8x32xf32, #tpu.memory_space<vmem>>, %arg2: memref<32x8xf32, #tpu.memory_space<vmem>>, %arg3: memref<1x1x8xf32, #tpu.memory_space<vmem>>, %arg4: memref<32x32xf32, #tpu.memory_space<vmem>>, %arg5: memref<1x1x32xf32, #tpu.memory_space<vmem>>, %arg6: memref<8x32xf32, #tpu.memory_space<vmem>>, %arg7: memref<32x32xf32, #tpu.memory_space<vmem>>, %arg8: memref<1x32xf32, #tpu.memory_space<vmem>>, %arg9: memref<32x8xf32, #tpu.memory_space<vmem>>, %arg10: memref<1x1x8xf32, #tpu.memory_space<vmem>>, %arg11: memref<32x32xf32, #tpu.memory_space<vmem>>, %arg12: memref<1x1x32xf32, #tpu.memory_space<vmem>>, %arg13: memref<8x32xf32, #tpu.memory_space<vmem>>, %arg14: memref<32x32xf32, #tpu.memory_space<vmem>>, %arg15: memref<1x32xf32, #tpu.memory_space<vmem>>, %arg16: memref<64x8xf32, #tpu.memory_space<vmem>>, %arg17: memref<1x1x8xf32, #tpu.memory_space<vmem>>, %arg18: memref<64x64xf32, #tpu.memory_space<vmem>>, %arg19: memref<1x1x64xf32, #tpu.memory_space<vmem>>, %arg20: memref<8x64xf32, #tpu.memory_space<vmem>>, %arg21: memref<64x64xf32, #tpu.memory_space<vmem>>, %arg22: memref<1x64xf32, #tpu.memory_space<vmem>>, %arg23: memref<2x512xf32, #tpu.memory_space<vmem>>) attributes {dimension_semantics = [], scalar_prefetch = 0 : i64, scratch_operands = 0 : i64, tpu.core_type = #tpu.core_type<tc>} {
    %c0 = arith.constant 0 : index
    %c0_0 = arith.constant 0 : index
    %c0_1 = arith.constant 0 : index
    %0 = vector.load %arg0[%c0, %c0_0, %c0_1] : memref<2x8x32xf32, #tpu.memory_space<vmem>>, vector<2x8x32xf32>
    %c0_2 = arith.constant 0 : index
    %c0_3 = arith.constant 0 : index
    %c0_4 = arith.constant 0 : index
    %1 = vector.load %arg1[%c0_2, %c0_3, %c0_4] : memref<2x8x32xf32, #tpu.memory_space<vmem>>, vector<2x8x32xf32>
    %c0_5 = arith.constant 0 : index
    %c0_6 = arith.constant 0 : index
    %2 = vector.load %arg2[%c0_5, %c0_6] : memref<32x8xf32, #tpu.memory_space<vmem>>, vector<32x8xf32>
    %3 = vector.shape_cast %2 : vector<32x8xf32> to vector<1x32x8xf32>
    %4 = vector.broadcast %3 : vector<1x32x8xf32> to vector<2x32x8xf32>
    "tpu.trace_start"() <{level = 10 : i32, message = "btd,bdh->bth"}> : () -> ()
    %cst = arith.constant dense<0.000000e+00> : vector<2x8x8xf32>
    %5 = tpu.matmul %0, %4, %cst {dimension_numbers = #tpu.dot_dimension_numbers<[2], [1], [1], [2], [0, 0, 0, 1, 1, 2], [0], [0]>} : vector<2x8x32xf32>, vector<2x32x8xf32>, vector<2x8x8xf32> -> vector<2x8x8xf32>
    "tpu.trace_stop"() : () -> ()
    %c0_7 = arith.constant 0 : index
    %c0_8 = arith.constant 0 : index
    %c0_9 = arith.constant 0 : index
    %6 = vector.load %arg3[%c0_7, %c0_8, %c0_9] : memref<1x1x8xf32, #tpu.memory_space<vmem>>, vector<1x1x8xf32>
    %7 = vector.broadcast %6 : vector<1x1x8xf32> to vector<2x8x8xf32>
    %8 = arith.addf %5, %7 : vector<2x8x8xf32>
    %cst_10 = arith.constant dense<0xFF800000> : vector<2x8xf32>
    %9 = vector.multi_reduction <maximumf>, %8, %cst_10 [1] : vector<2x8x8xf32> to vector<2x8xf32>
    %10 = vector.shape_cast %9 : vector<2x8xf32> to vector<2x1x8xf32>
    %11 = vector.broadcast %10 : vector<2x1x8xf32> to vector<2x8x8xf32>
    %12 = arith.subf %8, %11 : vector<2x8x8xf32>
    %13 = math.exp %12 : vector<2x8x8xf32>
    %cst_11 = arith.constant dense<0.000000e+00> : vector<2x8xf32>
    %14 = vector.multi_reduction <add>, %13, %cst_11 [1] : vector<2x8x8xf32> to vector<2x8xf32>
    %15 = vector.shape_cast %14 : vector<2x8xf32> to vector<2x1x8xf32>
    %16 = tpu.reciprocal %15 {approx = true} : vector<2x1x8xf32> -> vector<2x1x8xf32>
    %17 = vector.broadcast %16 : vector<2x1x8xf32> to vector<2x8x8xf32>
    %18 = arith.mulf %13, %17 : vector<2x8x8xf32>
    %c0_12 = arith.constant 0 : index
    %c0_13 = arith.constant 0 : index
    %19 = vector.load %arg4[%c0_12, %c0_13] : memref<32x32xf32, #tpu.memory_space<vmem>>, vector<32x32xf32>
    %20 = vector.shape_cast %19 : vector<32x32xf32> to vector<1x32x32xf32>
    %21 = vector.broadcast %20 : vector<1x32x32xf32> to vector<2x32x32xf32>
    "tpu.trace_start"() <{level = 10 : i32, message = "btd,bde->bte"}> : () -> ()
    %cst_14 = arith.constant dense<0.000000e+00> : vector<2x8x32xf32>
    %22 = tpu.matmul %0, %21, %cst_14 {dimension_numbers = #tpu.dot_dimension_numbers<[2], [1], [1], [2], [0, 0, 0, 1, 1, 2], [0], [0]>} : vector<2x8x32xf32>, vector<2x32x32xf32>, vector<2x8x32xf32> -> vector<2x8x32xf32>
    "tpu.trace_stop"() : () -> ()
    %c0_15 = arith.constant 0 : index
    %c0_16 = arith.constant 0 : index
    %c0_17 = arith.constant 0 : index
    %23 = vector.load %arg5[%c0_15, %c0_16, %c0_17] : memref<1x1x32xf32, #tpu.memory_space<vmem>>, vector<1x1x32xf32>
    %24 = vector.broadcast %23 : vector<1x1x32xf32> to vector<2x8x32xf32>
    %25 = arith.addf %22, %24 : vector<2x8x32xf32>
    %c0_18 = arith.constant 0 : index
    %c0_19 = arith.constant 0 : index
    %26 = vector.load %arg6[%c0_18, %c0_19] : memref<8x32xf32, #tpu.memory_space<vmem>>, vector<8x32xf32>
    %27 = vector.shape_cast %26 : vector<8x32xf32> to vector<1x8x32xf32>
    %28 = vector.broadcast %27 : vector<1x8x32xf32> to vector<2x8x32xf32>
    "tpu.trace_start"() <{level = 10 : i32, message = "bth,bhd->btd"}> : () -> ()
    %cst_20 = arith.constant dense<0.000000e+00> : vector<2x8x32xf32>
    %29 = tpu.matmul %18, %28, %cst_20 {dimension_numbers = #tpu.dot_dimension_numbers<[2], [1], [1], [2], [0, 0, 0, 1, 1, 2], [0], [0]>} : vector<2x8x8xf32>, vector<2x8x32xf32>, vector<2x8x32xf32> -> vector<2x8x32xf32>
    "tpu.trace_stop"() : () -> ()
    %30 = arith.mulf %29, %25 : vector<2x8x32xf32>
    %cst_21 = arith.constant dense<0.000000e+00> : vector<2x32xf32>
    %31 = vector.multi_reduction <add>, %30, %cst_21 [1] : vector<2x8x32xf32> to vector<2x32xf32>
    %c0_22 = arith.constant 0 : index
    %c0_23 = arith.constant 0 : index
    %32 = vector.load %arg7[%c0_22, %c0_23] : memref<32x32xf32, #tpu.memory_space<vmem>>, vector<32x32xf32>
    %cst_24 = arith.constant dense<0.000000e+00> : vector<2x32xf32>
    %33 = tpu.matmul %31, %32, %cst_24 {dimension_numbers = #tpu.dot_dimension_numbers<[1], [0], [0], [1], [0, 0, 1, 1], [], []>} : vector<2x32xf32>, vector<32x32xf32>, vector<2x32xf32> -> vector<2x32xf32>
    %c0_25 = arith.constant 0 : index
    %c0_26 = arith.constant 0 : index
    %34 = vector.load %arg8[%c0_25, %c0_26] : memref<1x32xf32, #tpu.memory_space<vmem>>, vector<1x32xf32>
    %35 = vector.broadcast %34 : vector<1x32xf32> to vector<2x32xf32>
    %36 = arith.addf %33, %35 : vector<2x32xf32>
    %c0_27 = arith.constant 0 : index
    %c0_28 = arith.constant 0 : index
    %37 = vector.load %arg9[%c0_27, %c0_28] : memref<32x8xf32, #tpu.memory_space<vmem>>, vector<32x8xf32>
    %38 = vector.shape_cast %37 : vector<32x8xf32> to vector<1x32x8xf32>
    %39 = vector.broadcast %38 : vector<1x32x8xf32> to vector<2x32x8xf32>
    "tpu.trace_start"() <{level = 10 : i32, message = "btd,bdh->bth"}> : () -> ()
    %cst_29 = arith.constant dense<0.000000e+00> : vector<2x8x8xf32>
    %40 = tpu.matmul %1, %39, %cst_29 {dimension_numbers = #tpu.dot_dimension_numbers<[2], [1], [1], [2], [0, 0, 0, 1, 1, 2], [0], [0]>} : vector<2x8x32xf32>, vector<2x32x8xf32>, vector<2x8x8xf32> -> vector<2x8x8xf32>
    "tpu.trace_stop"() : () -> ()
    %c0_30 = arith.constant 0 : index
    %c0_31 = arith.constant 0 : index
    %c0_32 = arith.constant 0 : index
    %41 = vector.load %arg10[%c0_30, %c0_31, %c0_32] : memref<1x1x8xf32, #tpu.memory_space<vmem>>, vector<1x1x8xf32>
    %42 = vector.broadcast %41 : vector<1x1x8xf32> to vector<2x8x8xf32>
    %43 = arith.addf %40, %42 : vector<2x8x8xf32>
    %cst_33 = arith.constant dense<0xFF800000> : vector<2x8xf32>
    %44 = vector.multi_reduction <maximumf>, %43, %cst_33 [1] : vector<2x8x8xf32> to vector<2x8xf32>
    %45 = vector.shape_cast %44 : vector<2x8xf32> to vector<2x1x8xf32>
    %46 = vector.broadcast %45 : vector<2x1x8xf32> to vector<2x8x8xf32>
    %47 = arith.subf %43, %46 : vector<2x8x8xf32>
    %48 = math.exp %47 : vector<2x8x8xf32>
    %cst_34 = arith.constant dense<0.000000e+00> : vector<2x8xf32>
    %49 = vector.multi_reduction <add>, %48, %cst_34 [1] : vector<2x8x8xf32> to vector<2x8xf32>
    %50 = vector.shape_cast %49 : vector<2x8xf32> to vector<2x1x8xf32>
    %51 = tpu.reciprocal %50 {approx = true} : vector<2x1x8xf32> -> vector<2x1x8xf32>
    %52 = vector.broadcast %51 : vector<2x1x8xf32> to vector<2x8x8xf32>
    %53 = arith.mulf %48, %52 : vector<2x8x8xf32>
    %c0_35 = arith.constant 0 : index
    %c0_36 = arith.constant 0 : index
    %54 = vector.load %arg11[%c0_35, %c0_36] : memref<32x32xf32, #tpu.memory_space<vmem>>, vector<32x32xf32>
    %55 = vector.shape_cast %54 : vector<32x32xf32> to vector<1x32x32xf32>
    %56 = vector.broadcast %55 : vector<1x32x32xf32> to vector<2x32x32xf32>
    "tpu.trace_start"() <{level = 10 : i32, message = "btd,bde->bte"}> : () -> ()
    %cst_37 = arith.constant dense<0.000000e+00> : vector<2x8x32xf32>
    %57 = tpu.matmul %1, %56, %cst_37 {dimension_numbers = #tpu.dot_dimension_numbers<[2], [1], [1], [2], [0, 0, 0, 1, 1, 2], [0], [0]>} : vector<2x8x32xf32>, vector<2x32x32xf32>, vector<2x8x32xf32> -> vector<2x8x32xf32>
    "tpu.trace_stop"() : () -> ()
    %c0_38 = arith.constant 0 : index
    %c0_39 = arith.constant 0 : index
    %c0_40 = arith.constant 0 : index
    %58 = vector.load %arg12[%c0_38, %c0_39, %c0_40] : memref<1x1x32xf32, #tpu.memory_space<vmem>>, vector<1x1x32xf32>
    %59 = vector.broadcast %58 : vector<1x1x32xf32> to vector<2x8x32xf32>
    %60 = arith.addf %57, %59 : vector<2x8x32xf32>
    %c0_41 = arith.constant 0 : index
    %c0_42 = arith.constant 0 : index
    %61 = vector.load %arg13[%c0_41, %c0_42] : memref<8x32xf32, #tpu.memory_space<vmem>>, vector<8x32xf32>
    %62 = vector.shape_cast %61 : vector<8x32xf32> to vector<1x8x32xf32>
    %63 = vector.broadcast %62 : vector<1x8x32xf32> to vector<2x8x32xf32>
    "tpu.trace_start"() <{level = 10 : i32, message = "bth,bhd->btd"}> : () -> ()
    %cst_43 = arith.constant dense<0.000000e+00> : vector<2x8x32xf32>
    %64 = tpu.matmul %53, %63, %cst_43 {dimension_numbers = #tpu.dot_dimension_numbers<[2], [1], [1], [2], [0, 0, 0, 1, 1, 2], [0], [0]>} : vector<2x8x8xf32>, vector<2x8x32xf32>, vector<2x8x32xf32> -> vector<2x8x32xf32>
    "tpu.trace_stop"() : () -> ()
    %65 = arith.mulf %64, %60 : vector<2x8x32xf32>
    %cst_44 = arith.constant dense<0.000000e+00> : vector<2x32xf32>
    %66 = vector.multi_reduction <add>, %65, %cst_44 [1] : vector<2x8x32xf32> to vector<2x32xf32>
    %c0_45 = arith.constant 0 : index
    %c0_46 = arith.constant 0 : index
    %67 = vector.load %arg14[%c0_45, %c0_46] : memref<32x32xf32, #tpu.memory_space<vmem>>, vector<32x32xf32>
    %cst_47 = arith.constant dense<0.000000e+00> : vector<2x32xf32>
    %68 = tpu.matmul %66, %67, %cst_47 {dimension_numbers = #tpu.dot_dimension_numbers<[1], [0], [0], [1], [0, 0, 1, 1], [], []>} : vector<2x32xf32>, vector<32x32xf32>, vector<2x32xf32> -> vector<2x32xf32>
    %c0_48 = arith.constant 0 : index
    %c0_49 = arith.constant 0 : index
    %69 = vector.load %arg15[%c0_48, %c0_49] : memref<1x32xf32, #tpu.memory_space<vmem>>, vector<1x32xf32>
    %70 = vector.broadcast %69 : vector<1x32xf32> to vector<2x32xf32>
    %71 = arith.addf %68, %70 : vector<2x32xf32>
    %72 = tpu.concatenate %36, %71 in 1 : vector<2x32xf32>, vector<2x32xf32> -> vector<2x64xf32>
    %73 = vector.shape_cast %72 : vector<2x64xf32> to vector<2x1x64xf32>
    %74 = vector.shape_cast %73 : vector<2x1x64xf32> to vector<2x1x64xf32>
    %75 = vector.broadcast %74 : vector<2x1x64xf32> to vector<2x8x64xf32>
    %c0_50 = arith.constant 0 : index
    %c0_51 = arith.constant 0 : index
    %76 = vector.load %arg16[%c0_50, %c0_51] : memref<64x8xf32, #tpu.memory_space<vmem>>, vector<64x8xf32>
    %77 = vector.shape_cast %76 : vector<64x8xf32> to vector<1x64x8xf32>
    %78 = vector.broadcast %77 : vector<1x64x8xf32> to vector<2x64x8xf32>
    "tpu.trace_start"() <{level = 10 : i32, message = "btd,bdh->bth"}> : () -> ()
    %cst_52 = arith.constant dense<0.000000e+00> : vector<2x8x8xf32>
    %79 = tpu.matmul %75, %78, %cst_52 {dimension_numbers = #tpu.dot_dimension_numbers<[2], [1], [1], [2], [0, 0, 0, 1, 1, 2], [0], [0]>} : vector<2x8x64xf32>, vector<2x64x8xf32>, vector<2x8x8xf32> -> vector<2x8x8xf32>
    "tpu.trace_stop"() : () -> ()
    %c0_53 = arith.constant 0 : index
    %c0_54 = arith.constant 0 : index
    %c0_55 = arith.constant 0 : index
    %80 = vector.load %arg17[%c0_53, %c0_54, %c0_55] : memref<1x1x8xf32, #tpu.memory_space<vmem>>, vector<1x1x8xf32>
    %81 = vector.broadcast %80 : vector<1x1x8xf32> to vector<2x8x8xf32>
    %82 = arith.addf %79, %81 : vector<2x8x8xf32>
    %cst_56 = arith.constant dense<0xFF800000> : vector<2x8xf32>
    %83 = vector.multi_reduction <maximumf>, %82, %cst_56 [1] : vector<2x8x8xf32> to vector<2x8xf32>
    %84 = vector.shape_cast %83 : vector<2x8xf32> to vector<2x1x8xf32>
    %85 = vector.broadcast %84 : vector<2x1x8xf32> to vector<2x8x8xf32>
    %86 = arith.subf %82, %85 : vector<2x8x8xf32>
    %87 = math.exp %86 : vector<2x8x8xf32>
    %cst_57 = arith.constant dense<0.000000e+00> : vector<2x8xf32>
    %88 = vector.multi_reduction <add>, %87, %cst_57 [1] : vector<2x8x8xf32> to vector<2x8xf32>
    %89 = vector.shape_cast %88 : vector<2x8xf32> to vector<2x1x8xf32>
    %90 = tpu.reciprocal %89 {approx = true} : vector<2x1x8xf32> -> vector<2x1x8xf32>
    %91 = vector.broadcast %90 : vector<2x1x8xf32> to vector<2x8x8xf32>
    %92 = arith.mulf %87, %91 : vector<2x8x8xf32>
    %c0_58 = arith.constant 0 : index
    %c0_59 = arith.constant 0 : index
    %93 = vector.load %arg18[%c0_58, %c0_59] : memref<64x64xf32, #tpu.memory_space<vmem>>, vector<64x64xf32>
    %94 = vector.shape_cast %93 : vector<64x64xf32> to vector<1x64x64xf32>
    %95 = vector.broadcast %94 : vector<1x64x64xf32> to vector<2x64x64xf32>
    "tpu.trace_start"() <{level = 10 : i32, message = "btd,bde->bte"}> : () -> ()
    %cst_60 = arith.constant dense<0.000000e+00> : vector<2x8x64xf32>
    %96 = tpu.matmul %75, %95, %cst_60 {dimension_numbers = #tpu.dot_dimension_numbers<[2], [1], [1], [2], [0, 0, 0, 1, 1, 2], [0], [0]>} : vector<2x8x64xf32>, vector<2x64x64xf32>, vector<2x8x64xf32> -> vector<2x8x64xf32>
    "tpu.trace_stop"() : () -> ()
    %c0_61 = arith.constant 0 : index
    %c0_62 = arith.constant 0 : index
    %c0_63 = arith.constant 0 : index
    %97 = vector.load %arg19[%c0_61, %c0_62, %c0_63] : memref<1x1x64xf32, #tpu.memory_space<vmem>>, vector<1x1x64xf32>
    %98 = vector.broadcast %97 : vector<1x1x64xf32> to vector<2x8x64xf32>
    %99 = arith.addf %96, %98 : vector<2x8x64xf32>
    %c0_64 = arith.constant 0 : index
    %c0_65 = arith.constant 0 : index
    %100 = vector.load %arg20[%c0_64, %c0_65] : memref<8x64xf32, #tpu.memory_space<vmem>>, vector<8x64xf32>
    %101 = vector.shape_cast %100 : vector<8x64xf32> to vector<1x8x64xf32>
    %102 = vector.broadcast %101 : vector<1x8x64xf32> to vector<2x8x64xf32>
    "tpu.trace_start"() <{level = 10 : i32, message = "bth,bhd->btd"}> : () -> ()
    %cst_66 = arith.constant dense<0.000000e+00> : vector<2x8x64xf32>
    %103 = tpu.matmul %92, %102, %cst_66 {dimension_numbers = #tpu.dot_dimension_numbers<[2], [1], [1], [2], [0, 0, 0, 1, 1, 2], [0], [0]>} : vector<2x8x8xf32>, vector<2x8x64xf32>, vector<2x8x64xf32> -> vector<2x8x64xf32>
    "tpu.trace_stop"() : () -> ()
    %104 = arith.mulf %103, %99 : vector<2x8x64xf32>
    %cst_67 = arith.constant dense<0.000000e+00> : vector<2x64xf32>
    %105 = vector.multi_reduction <add>, %104, %cst_67 [1] : vector<2x8x64xf32> to vector<2x64xf32>
    %c0_68 = arith.constant 0 : index
    %c0_69 = arith.constant 0 : index
    %106 = vector.load %arg21[%c0_68, %c0_69] : memref<64x64xf32, #tpu.memory_space<vmem>>, vector<64x64xf32>
    %cst_70 = arith.constant dense<0.000000e+00> : vector<2x64xf32>
    %107 = tpu.matmul %105, %106, %cst_70 {dimension_numbers = #tpu.dot_dimension_numbers<[1], [0], [0], [1], [0, 0, 1, 1], [], []>} : vector<2x64xf32>, vector<64x64xf32>, vector<2x64xf32> -> vector<2x64xf32>
    %c0_71 = arith.constant 0 : index
    %c0_72 = arith.constant 0 : index
    %108 = vector.load %arg22[%c0_71, %c0_72] : memref<1x64xf32, #tpu.memory_space<vmem>>, vector<1x64xf32>
    %109 = vector.broadcast %108 : vector<1x64xf32> to vector<2x64xf32>
    %110 = arith.addf %107, %109 : vector<2x64xf32>
    %111 = tpu.concatenate %110, %110, %110, %110, %110, %110, %110, %110 in 1 : vector<2x64xf32>, vector<2x64xf32>, vector<2x64xf32>, vector<2x64xf32>, vector<2x64xf32>, vector<2x64xf32>, vector<2x64xf32>, vector<2x64xf32> -> vector<2x512xf32>
    %c0_73 = arith.constant 0 : index
    %c0_74 = arith.constant 0 : index
    %112 = vector.load %arg23[%c0_73, %c0_74] : memref<2x512xf32, #tpu.memory_space<vmem>>, vector<2x512xf32>
    tpu.vector_store %arg23[%c0_73, %c0_74], %111 {strides = array<i32>} : memref<2x512xf32, #tpu.memory_space<vmem>>, vector<2x512xf32>,
    return
  }
}

</mosaic_0001>

<llo_original>
// kernel: tpu_custom_call.1
$region0: #{tpu_custom_call.1}
  #allocation0 [shape = 'u32[]', space=smem, size = 0x4, offset = 0x4, fixed_abs, tag = 'smem constant byte address 0x4 - core index']
  #allocation1 [shape = 'u32[72,128]{1,0:T(1,128)}', space=vmem, size = 0x9000, scoped, tag = 'internal scratch']
  %s0 = inlined_call_operand.hbm [shape: f32[2,8,32], index: 0, kind: input, shape index: {}]
  %s1 = inlined_call_operand.hbm [shape: f32[2,8,32], index: 1, kind: input, shape index: {}]
  %s2 = inlined_call_operand.vmem [shape: f32[32,8], index: 2, kind: input, shape index: {}]
  %s3 = inlined_call_operand.vmem [shape: f32[1,1,8], index: 3, kind: input, shape index: {}]
  %s4 = inlined_call_operand.hbm [shape: f32[32,32], index: 4, kind: input, shape index: {}]
  %s5 = inlined_call_operand.hbm [shape: f32[1,1,32], index: 5, kind: input, shape index: {}]
  %s6 = inlined_call_operand.vmem [shape: f32[8,32], index: 6, kind: input, shape index: {}]
  %s7 = inlined_call_operand.hbm [shape: f32[32,32], index: 7, kind: input, shape index: {}]
  %s8 = inlined_call_operand.hbm [shape: f32[1,32], index: 8, kind: input, shape index: {}]
  %s9 = inlined_call_operand.vmem [shape: f32[32,8], index: 9, kind: input, shape index: {}]
  %s10 = inlined_call_operand.hbm [shape: f32[1,1,8], index: 10, kind: input, shape index: {}]
  %s11 = inlined_call_operand.hbm [shape: f32[32,32], index: 11, kind: input, shape index: {}]
  %s12 = inlined_call_operand.hbm [shape: f32[1,1,32], index: 12, kind: input, shape index: {}]
  %s13 = inlined_call_operand.vmem [shape: f32[8,32], index: 13, kind: input, shape index: {}]
  %s14 = inlined_call_operand.hbm [shape: f32[32,32], index: 14, kind: input, shape index: {}]
  %s15 = inlined_call_operand.hbm [shape: f32[1,32], index: 15, kind: input, shape index: {}]
  %s16 = inlined_call_operand.vmem [shape: f32[64,8], index: 16, kind: input, shape index: {}]
  %s17 = inlined_call_operand.hbm [shape: f32[1,1,8], index: 17, kind: input, shape index: {}]
  %s18 = inlined_call_operand.vmem [shape: f32[64,64], index: 18, kind: input, shape index: {}]
  %s19 = inlined_call_operand.hbm [shape: f32[1,1,64], index: 19, kind: input, shape index: {}]
  %s20 = inlined_call_operand.vmem [shape: f32[8,64], index: 20, kind: input, shape index: {}]
  %s21 = inlined_call_operand.vmem [shape: f32[64,64], index: 21, kind: input, shape index: {}]
  %s22 = inlined_call_operand.vmem [shape: f32[1,64], index: 22, kind: input, shape index: {}]
  %s23 = inlined_call_operand.hbm [shape: f32[2,512], index: 23, kind: output, shape index: {}]
  %s24 = sld [smem:[#allocation0]]
  $region154: #{tpu_custom_call.1} parent=0
    _
  %s26 = ssub.s32 1, %s24
  %s27 = scalar_select 0, %s26, %s24
  $region1: #{tpu_custom_call.1} parent=0
    #allocation2 [shape = 'u8[8192]{0}', space=vmem, size = 0x2000, scoped, tag = 'input window, operand 0, single buffered']
    #allocation3 [shape = 's32[1]{0}', space=sflag, size = 0x4, scoped, tag = 'scoped memory for tpu_custom_call.1']
    #allocation4 [shape = 's32[1]{0}', space=sflag, size = 0x4, scoped, tag = 'scoped memory for tpu_custom_call.1']
    #allocation5 [shape = 'u8[8192]{0}', space=vmem, size = 0x2000, scoped, tag = 'input window, operand 1, single buffered']
    #allocation6 [shape = 's32[1]{0}', space=sflag, size = 0x4, scoped, tag = 'scoped memory for tpu_custom_call.1']
    #allocation7 [shape = 'u8[16384]{0}', space=vmem, size = 0x4000, scoped, tag = 'input window, operand 4, single buffered']
    #allocation8 [shape = 'u8[512]{0}', space=vmem, size = 0x400, scoped, tag = 'input window, operand 5, single buffered']
    #allocation9 [shape = 's32[1]{0}', space=sflag, size = 0x4, scoped, tag = 'scoped memory for tpu_custom_call.1']
    #allocation10 [shape = 'u8[16384]{0}', space=vmem, size = 0x4000, scoped, tag = 'input window, operand 7, single buffered']
    #allocation11 [shape = 'u8[512]{0}', space=vmem, size = 0x400, scoped, tag = 'input window, operand 8, single buffered']
    #allocation12 [shape = 's32[1]{0}', space=sflag, size = 0x4, scoped, tag = 'scoped memory for tpu_custom_call.1']
    #allocation13 [shape = 'u8[512]{0}', space=vmem, size = 0x400, scoped, tag = 'input window, operand 10, single buffered']
    #allocation14 [shape = 'u8[16384]{0}', space=vmem, size = 0x4000, scoped, tag = 'input window, operand 11, single buffered']
    #allocation15 [shape = 's32[1]{0}', space=sflag, size = 0x4, scoped, tag = 'scoped memory for tpu_custom_call.1']
    #allocation16 [shape = 'u8[512]{0}', space=vmem, size = 0x400, scoped, tag = 'input window, operand 12, single buffered']
    #allocation17 [shape = 'u8[16384]{0}', space=vmem, size = 0x4000, scoped, tag = 'input window, operand 14, single buffered']
    #allocation18 [shape = 's32[1]{0}', space=sflag, size = 0x4, scoped, tag = 'scoped memory for tpu_custom_call.1']
    #allocation19 [shape = 'u8[512]{0}', space=vmem, size = 0x400, scoped, tag = 'input window, operand 15, single buffered']
    #allocation20 [shape = 'u8[512]{0}', space=vmem, size = 0x400, scoped, tag = 'input window, operand 17, single buffered']
    #allocation21 [shape = 's32[1]{0}', space=sflag, size = 0x4, scoped, tag = 'scoped memory for tpu_custom_call.1']
    #allocation22 [shape = 'u8[512]{0}', space=vmem, size = 0x400, scoped, tag = 'input window, operand 19, single buffered']
    #allocation23 [shape = 'u8[4096]{0}', space=vmem, size = 0x1000, scoped, tag = 'output window, operand 0, single buffered']
    %28 = vsyncpa [#allocation3], 0
    %29 = vsyncpa [#allocation6], 0
    %30 = vsyncpa [#allocation9], 0
    %31 = vsyncpa [#allocation12], 0
    %32 = vsyncpa [#allocation15], 0
    %33 = vsyncpa [#allocation18], 0
    %34 = vsyncpa [#allocation21], 0
    %35 = vsyncpa [#allocation4], 0
    // Predicated region
    $region2: #{tpu_custom_call.1} parent=1 // pred_check
      _
    $region3: #{tpu_custom_call.1} parent=1 // pred_check_branch
      %37 = sbr.rel (0) target = $region5
    $region4: #{tpu_custom_call.1} parent=1 // pred_region
      %39 = vsyncadd [#allocation3], 0
      %s40 = sshll.u32 %s0, 4
      %s41 = int_to_ptr.hbm [resolvable:$true] %s40
      %s42 = sshll.u32 [#allocation2], 4
      %s43 = int_to_ptr.vmem [resolvable:$true] %s42
      %48 = dma.hbm_to_vmem [thread:$0]  %s41, 256, %s43, [#allocation3], 128, 128, 8
    $region5: #{tpu_custom_call.1} parent=1 // pred_fallthru
      _
    // Predicated region
    $region6: #{tpu_custom_call.1} parent=1 // pred_check
      _
    $region7: #{tpu_custom_call.1} parent=1 // pred_check_branch
      %50 = sbr.rel (0) target = $region9
    $region8: #{tpu_custom_call.1} parent=1 // pred_region
      %52 = vsyncadd [#allocation6], 0
      %s53 = sshll.u32 %s1, 4
      %s54 = int_to_ptr.hbm [resolvable:$true] %s53
      %s55 = sshll.u32 [#allocation5], 4
      %s56 = int_to_ptr.vmem [resolvable:$true] %s55
      %61 = dma.hbm_to_vmem [thread:$0]  %s54, 256, %s56, [#allocation6], 128, 128, 8
    $region9: #{tpu_custom_call.1} parent=1 // pred_fallthru
      _
    // Predicated region
    $region10: #{tpu_custom_call.1} parent=1 // pred_check
      _
    $region11: #{tpu_custom_call.1} parent=1 // pred_check_branch
      %63 = sbr.rel (0) target = $region13
    $region12: #{tpu_custom_call.1} parent=1 // pred_region
      _
    $region13: #{tpu_custom_call.1} parent=1 // pred_fallthru
      _
    // Predicated region
    $region14: #{tpu_custom_call.1} parent=1 // pred_check
      _
    $region15: #{tpu_custom_call.1} parent=1 // pred_check_branch
      %65 = sbr.rel (0) target = $region17
    $region16: #{tpu_custom_call.1} parent=1 // pred_region
      _
    $region17: #{tpu_custom_call.1} parent=1 // pred_fallthru
      _
    // Predicated region
    $region18: #{tpu_custom_call.1} parent=1 // pred_check
      _
    $region19: #{tpu_custom_call.1} parent=1 // pred_check_branch
      %67 = sbr.rel (0) target = $region21
    $region20: #{tpu_custom_call.1} parent=1 // pred_region
      %69 = vsyncadd [#allocation6], 0
      %s70 = sshll.u32 %s4, 4
      %s71 = int_to_ptr.hbm [resolvable:$true] %s70
      %s72 = sshll.u32 [#allocation7], 4
      %s73 = int_to_ptr.vmem [resolvable:$true] %s72
      %78 = dma.hbm_to_vmem [thread:$0]  %s71, 512, %s73, [#allocation6], 128, 128, 8
    $region21: #{tpu_custom_call.1} parent=1 // pred_fallthru
      _
    // Predicated region
    $region22: #{tpu_custom_call.1} parent=1 // pred_check
      _
    $region23: #{tpu_custom_call.1} parent=1 // pred_check_branch
      %80 = sbr.rel (0) target = $region25
    $region24: #{tpu_custom_call.1} parent=1 // pred_region
      %82 = vsyncadd [#allocation9], 0
      %s84 = sshll.u32 %s5, 4
      %s85 = int_to_ptr.hbm [resolvable:$true] %s84
      %s86 = sshll.u32 [#allocation8], 4
      %s87 = int_to_ptr.vmem [resolvable:$true] %s86
      %89 = dma.hbm_to_vmem [thread:$0]  %s85, 16, %s87, [#allocation9]
    $region25: #{tpu_custom_call.1} parent=1 // pred_fallthru
      _
    // Predicated region
    $region26: #{tpu_custom_call.1} parent=1 // pred_check
      _
    $region27: #{tpu_custom_call.1} parent=1 // pred_check_branch
      %91 = sbr.rel (0) target = $region29
    $region28: #{tpu_custom_call.1} parent=1 // pred_region
      _
    $region29: #{tpu_custom_call.1} parent=1 // pred_fallthru
      _
    // Predicated region
    $region30: #{tpu_custom_call.1} parent=1 // pred_check
      _
    $region31: #{tpu_custom_call.1} parent=1 // pred_check_branch
      %93 = sbr.rel (0) target = $region33
    $region32: #{tpu_custom_call.1} parent=1 // pred_region
      %95 = vsyncadd [#allocation9], 0
      %s96 = sshll.u32 %s7, 4
      %s97 = int_to_ptr.hbm [resolvable:$true] %s96
      %s98 = sshll.u32 [#allocation10], 4
      %s99 = int_to_ptr.vmem [resolvable:$true] %s98
      %104 = dma.hbm_to_vmem [thread:$0]  %s97, 512, %s99, [#allocation9], 128, 128, 8
    $region33: #{tpu_custom_call.1} parent=1 // pred_fallthru
      _
    // Predicated region
    $region34: #{tpu_custom_call.1} parent=1 // pred_check
      _
    $region35: #{tpu_custom_call.1} parent=1 // pred_check_branch
      %106 = sbr.rel (0) target = $region37
    $region36: #{tpu_custom_call.1} parent=1 // pred_region
      %108 = vsyncadd [#allocation12], 0
      %s110 = sshll.u32 %s8, 4
      %s111 = int_to_ptr.hbm [resolvable:$true] %s110
      %s112 = sshll.u32 [#allocation11], 4
      %s113 = int_to_ptr.vmem [resolvable:$true] %s112
      %115 = dma.hbm_to_vmem [thread:$0]  %s111, 16, %s113, [#allocation12]
    $region37: #{tpu_custom_call.1} parent=1 // pred_fallthru
      _
    // Predicated region
    $region38: #{tpu_custom_call.1} parent=1 // pred_check
      _
    $region39: #{tpu_custom_call.1} parent=1 // pred_check_branch
      %117 = sbr.rel (0) target = $region41
    $region40: #{tpu_custom_call.1} parent=1 // pred_region
      _
    $region41: #{tpu_custom_call.1} parent=1 // pred_fallthru
      _
    // Predicated region
    $region42: #{tpu_custom_call.1} parent=1 // pred_check
      _
    $region43: #{tpu_custom_call.1} parent=1 // pred_check_branch
      %119 = sbr.rel (0) target = $region45
    $region44: #{tpu_custom_call.1} parent=1 // pred_region
      %121 = vsyncadd [#allocation12], 0
      %s123 = sshll.u32 %s10, 4
      %s124 = int_to_ptr.hbm [resolvable:$true] %s123
      %s125 = sshll.u32 [#allocation13], 4
      %s126 = int_to_ptr.vmem [resolvable:$true] %s125
      %128 = dma.hbm_to_vmem [thread:$0]  %s124, 16, %s126, [#allocation12]
    $region45: #{tpu_custom_call.1} parent=1 // pred_fallthru
      _
    // Predicated region
    $region46: #{tpu_custom_call.1} parent=1 // pred_check
      _
    $region47: #{tpu_custom_call.1} parent=1 // pred_check_branch
      %130 = sbr.rel (0) target = $region49
    $region48: #{tpu_custom_call.1} parent=1 // pred_region
      %132 = vsyncadd [#allocation15], 0
      %s133 = sshll.u32 %s11, 4
      %s134 = int_to_ptr.hbm [resolvable:$true] %s133
      %s135 = sshll.u32 [#allocation14], 4
      %s136 = int_to_ptr.vmem [resolvable:$true] %s135
      %141 = dma.hbm_to_vmem [thread:$0]  %s134, 512, %s136, [#allocation15], 128, 128, 8
    $region49: #{tpu_custom_call.1} parent=1 // pred_fallthru
      _
    // Predicated region
    $region50: #{tpu_custom_call.1} parent=1 // pred_check
      _
    $region51: #{tpu_custom_call.1} parent=1 // pred_check_branch
      %143 = sbr.rel (0) target = $region53
    $region52: #{tpu_custom_call.1} parent=1 // pred_region
      %145 = vsyncadd [#allocation15], 0
      %s147 = sshll.u32 %s12, 4
      %s148 = int_to_ptr.hbm [resolvable:$true] %s147
      %s149 = sshll.u32 [#allocation16], 4
      %s150 = int_to_ptr.vmem [resolvable:$true] %s149
      %152 = dma.hbm_to_vmem [thread:$0]  %s148, 16, %s150, [#allocation15]
    $region53: #{tpu_custom_call.1} parent=1 // pred_fallthru
      _
    // Predicated region
    $region54: #{tpu_custom_call.1} parent=1 // pred_check
      _
    $region55: #{tpu_custom_call.1} parent=1 // pred_check_branch
      %154 = sbr.rel (0) target = $region57
    $region56: #{tpu_custom_call.1} parent=1 // pred_region
      _
    $region57: #{tpu_custom_call.1} parent=1 // pred_fallthru
      _
    // Predicated region
    $region58: #{tpu_custom_call.1} parent=1 // pred_check
      _
    $region59: #{tpu_custom_call.1} parent=1 // pred_check_branch
      %156 = sbr.rel (0) target = $region61
    $region60: #{tpu_custom_call.1} parent=1 // pred_region
      %158 = vsyncadd [#allocation18], 0
      %s159 = sshll.u32 %s14, 4
      %s160 = int_to_ptr.hbm [resolvable:$true] %s159
      %s161 = sshll.u32 [#allocation17], 4
      %s162 = int_to_ptr.vmem [resolvable:$true] %s161
      %167 = dma.hbm_to_vmem [thread:$0]  %s160, 512, %s162, [#allocation18], 128, 128, 8
    $region61: #{tpu_custom_call.1} parent=1 // pred_fallthru
      _
    // Predicated region
    $region62: #{tpu_custom_call.1} parent=1 // pred_check
      _
    $region63: #{tpu_custom_call.1} parent=1 // pred_check_branch
      %169 = sbr.rel (0) target = $region65
    $region64: #{tpu_custom_call.1} parent=1 // pred_region
      %171 = vsyncadd [#allocation18], 0
      %s173 = sshll.u32 %s15, 4
      %s174 = int_to_ptr.hbm [resolvable:$true] %s173
      %s175 = sshll.u32 [#allocation19], 4
      %s176 = int_to_ptr.vmem [resolvable:$true] %s175
      %178 = dma.hbm_to_vmem [thread:$0]  %s174, 16, %s176, [#allocation18]
    $region65: #{tpu_custom_call.1} parent=1 // pred_fallthru
      _
    // Predicated region
    $region66: #{tpu_custom_call.1} parent=1 // pred_check
      _
    $region67: #{tpu_custom_call.1} parent=1 // pred_check_branch
      %180 = sbr.rel (0) target = $region69
    $region68: #{tpu_custom_call.1} parent=1 // pred_region
      _
    $region69: #{tpu_custom_call.1} parent=1 // pred_fallthru
      _
    // Predicated region
    $region70: #{tpu_custom_call.1} parent=1 // pred_check
      _
    $region71: #{tpu_custom_call.1} parent=1 // pred_check_branch
      %182 = sbr.rel (0) target = $region73
    $region72: #{tpu_custom_call.1} parent=1 // pred_region
      %184 = vsyncadd [#allocation21], 0
      %s186 = sshll.u32 %s17, 4
      %s187 = int_to_ptr.hbm [resolvable:$true] %s186
      %s188 = sshll.u32 [#allocation20], 4
      %s189 = int_to_ptr.vmem [resolvable:$true] %s188
      %191 = dma.hbm_to_vmem [thread:$0]  %s187, 16, %s189, [#allocation21]
    $region73: #{tpu_custom_call.1} parent=1 // pred_fallthru
      _
    // Predicated region
    $region74: #{tpu_custom_call.1} parent=1 // pred_check
      _
    $region75: #{tpu_custom_call.1} parent=1 // pred_check_branch
      %193 = sbr.rel (0) target = $region77
    $region76: #{tpu_custom_call.1} parent=1 // pred_region
      _
    $region77: #{tpu_custom_call.1} parent=1 // pred_fallthru
      _
    // Predicated region
    $region78: #{tpu_custom_call.1} parent=1 // pred_check
      _
    $region79: #{tpu_custom_call.1} parent=1 // pred_check_branch
      %195 = sbr.rel (0) target = $region81
    $region80: #{tpu_custom_call.1} parent=1 // pred_region
      %197 = vsyncadd [#allocation21], 0
      %s199 = sshll.u32 %s19, 4
      %s200 = int_to_ptr.hbm [resolvable:$true] %s199
      %s201 = sshll.u32 [#allocation22], 4
      %s202 = int_to_ptr.vmem [resolvable:$true] %s201
      %204 = dma.hbm_to_vmem [thread:$0]  %s200, 16, %s202, [#allocation21]
    $region81: #{tpu_custom_call.1} parent=1 // pred_fallthru
      _
    // Predicated region
    $region82: #{tpu_custom_call.1} parent=1 // pred_check
      _
    $region83: #{tpu_custom_call.1} parent=1 // pred_check_branch
      %206 = sbr.rel (0) target = $region85
    $region84: #{tpu_custom_call.1} parent=1 // pred_region
      _
    $region85: #{tpu_custom_call.1} parent=1 // pred_fallthru
      _
    // Predicated region
    $region86: #{tpu_custom_call.1} parent=1 // pred_check
      _
    $region87: #{tpu_custom_call.1} parent=1 // pred_check_branch
      %208 = sbr.rel (0) target = $region89
    $region88: #{tpu_custom_call.1} parent=1 // pred_region
      _
    $region89: #{tpu_custom_call.1} parent=1 // pred_fallthru
      _
    // Predicated region
    $region90: #{tpu_custom_call.1} parent=1 // pred_check
      _
    $region91: #{tpu_custom_call.1} parent=1 // pred_check_branch
      %210 = sbr.rel (0) target = $region93
    $region92: #{tpu_custom_call.1} parent=1 // pred_region
      _
    $region93: #{tpu_custom_call.1} parent=1 // pred_fallthru
      _
    // Predicated region
    $region94: #{tpu_custom_call.1} parent=1 // pred_check
      _
    $region95: #{tpu_custom_call.1} parent=1 // pred_check_branch
      %212 = sbr.rel (0) target = $region97
    $region96: #{tpu_custom_call.1} parent=1 // pred_region
      %214 = dma.done [#allocation3], 256
    $region97: #{tpu_custom_call.1} parent=1 // pred_fallthru
      _
    // Predicated region
    $region98: #{tpu_custom_call.1} parent=1 // pred_check
      _
    $region99: #{tpu_custom_call.1} parent=1 // pred_check_branch
      %216 = sbr.rel (0) target = $region101
    $region100: #{tpu_custom_call.1} parent=1 // pred_region
      %218 = dma.done [#allocation6], 256
    $region101: #{tpu_custom_call.1} parent=1 // pred_fallthru
      _
    // Predicated region
    $region102: #{tpu_custom_call.1} parent=1 // pred_check
      _
    $region103: #{tpu_custom_call.1} parent=1 // pred_check_branch
      %220 = sbr.rel (0) target = $region105
    $region104: #{tpu_custom_call.1} parent=1 // pred_region
      %222 = dma.done [#allocation6], 512
    $region105: #{tpu_custom_call.1} parent=1 // pred_fallthru
      _
    // Predicated region
    $region106: #{tpu_custom_call.1} parent=1 // pred_check
      _
    $region107: #{tpu_custom_call.1} parent=1 // pred_check_branch
      %224 = sbr.rel (0) target = $region109
    $region108: #{tpu_custom_call.1} parent=1 // pred_region
      %226 = dma.done [#allocation9], 16
    $region109: #{tpu_custom_call.1} parent=1 // pred_fallthru
      _
    // Predicated region
    $region110: #{tpu_custom_call.1} parent=1 // pred_check
      _
    $region111: #{tpu_custom_call.1} parent=1 // pred_check_branch
      %228 = sbr.rel (0) target = $region113
    $region112: #{tpu_custom_call.1} parent=1 // pred_region
      %230 = dma.done [#allocation9], 512
    $region113: #{tpu_custom_call.1} parent=1 // pred_fallthru
      _
    // Predicated region
    $region114: #{tpu_custom_call.1} parent=1 // pred_check
      _
    $region115: #{tpu_custom_call.1} parent=1 // pred_check_branch
      %232 = sbr.rel (0) target = $region117
    $region116: #{tpu_custom_call.1} parent=1 // pred_region
      %234 = dma.done [#allocation12], 16
    $region117: #{tpu_custom_call.1} parent=1 // pred_fallthru
      _
    // Predicated region
    $region118: #{tpu_custom_call.1} parent=1 // pred_check
      _
    $region119: #{tpu_custom_call.1} parent=1 // pred_check_branch
      %236 = sbr.rel (0) target = $region121
    $region120: #{tpu_custom_call.1} parent=1 // pred_region
      %238 = dma.done [#allocation12], 16
    $region121: #{tpu_custom_call.1} parent=1 // pred_fallthru
      _
    // Predicated region
    $region122: #{tpu_custom_call.1} parent=1 // pred_check
      _
    $region123: #{tpu_custom_call.1} parent=1 // pred_check_branch
      %240 = sbr.rel (0) target = $region125
    $region124: #{tpu_custom_call.1} parent=1 // pred_region
      %242 = dma.done [#allocation15], 512
    $region125: #{tpu_custom_call.1} parent=1 // pred_fallthru
      _
    // Predicated region
    $region126: #{tpu_custom_call.1} parent=1 // pred_check
      _
    $region127: #{tpu_custom_call.1} parent=1 // pred_check_branch
      %244 = sbr.rel (0) target = $region129
    $region128: #{tpu_custom_call.1} parent=1 // pred_region
      %246 = dma.done [#allocation15], 16
    $region129: #{tpu_custom_call.1} parent=1 // pred_fallthru
      _
    // Predicated region
    $region130: #{tpu_custom_call.1} parent=1 // pred_check
      _
    $region131: #{tpu_custom_call.1} parent=1 // pred_check_branch
      %248 = sbr.rel (0) target = $region133
    $region132: #{tpu_custom_call.1} parent=1 // pred_region
      %250 = dma.done [#allocation18], 512
    $region133: #{tpu_custom_call.1} parent=1 // pred_fallthru
      _
    // Predicated region
    $region134: #{tpu_custom_call.1} parent=1 // pred_check
      _
    $region135: #{tpu_custom_call.1} parent=1 // pred_check_branch
      %252 = sbr.rel (0) target = $region137
    $region136: #{tpu_custom_call.1} parent=1 // pred_region
      %254 = dma.done [#allocation18], 16
    $region137: #{tpu_custom_call.1} parent=1 // pred_fallthru
      _
    // Predicated region
    $region138: #{tpu_custom_call.1} parent=1 // pred_check
      _
    $region139: #{tpu_custom_call.1} parent=1 // pred_check_branch
      %256 = sbr.rel (0) target = $region141
    $region140: #{tpu_custom_call.1} parent=1 // pred_region
      %258 = dma.done [#allocation21], 16
    $region141: #{tpu_custom_call.1} parent=1 // pred_fallthru
      _
    // Predicated region
    $region142: #{tpu_custom_call.1} parent=1 // pred_check
      _
    $region143: #{tpu_custom_call.1} parent=1 // pred_check_branch
      %260 = sbr.rel (0) target = $region145
    $region144: #{tpu_custom_call.1} parent=1 // pred_region
      %262 = dma.done [#allocation21], 16
    $region145: #{tpu_custom_call.1} parent=1 // pred_fallthru
      _
    %v263 = vld [vmem:[#allocation2] sm:$0xff]
    %v264 = vld [vmem:[#allocation2 + $0x8] sm:$0xff]
    %v265 = vld [vmem:[#allocation5] sm:$0xff]
    %v266 = vld [vmem:[#allocation5 + $0x8] sm:$0xff]
    %v267 = vld [vmem:[%s2] sm:$0xff]
    %v268 = vld [vmem:[%s2 + $0x8] sm:$0xff]
    %v269 = vld [vmem:[%s2 + $0x10] sm:$0xff]
    %v270 = vld [vmem:[%s2 + $0x18] sm:$0xff]
    %v271 = vld [vmem:[%s3] sm:$0x1]
    %v273 = vperm.slane %v271, 0
    %vm275 = vcmask 261120
    %v277 = vsel %vm275, %v263, 0
    %279 = vmatpush.msra.mxu0 0.0
    %280 = vmatpush.msra.mxu0 0.0
    %281 = vmatpush.msra.mxu0 0.0
    %282 = vmatpush.msra.mxu0 0.0
    %283 = vmatpush.msra.mxu0 0.0
    %284 = vmatpush.msra.mxu0 0.0
    %285 = vmatpush.msra.mxu0 0.0
    %286 = vmatpush.msra.mxu0 0.0
    %287 = vmatpush.msra.mxu0 0.0
    %288 = vmatpush.msra.mxu0 0.0
    %289 = vmatpush.msra.mxu0 0.0
    %290 = vmatpush.msra.mxu0 0.0
    %291 = vmatpush.msra.mxu0 %v270
    %292 = vmatpush.msra.mxu0 %v269
    %293 = vmatpush.msra.mxu0 %v268
    %294 = vmatpush.msra.mxu0 %v267
    %295 = vmatmul.f32.gmra.mxu0 %v277
    %v296 = vpop.f32.mrf.mxu0
    %v297 = vadd.f32 %v273, %v296
    %298 = vdwg.mxu0
    %v300 = vsel %vm275, %v264, 0
    %302 = vmatpush.msra.mxu0 0.0
    %303 = vmatpush.msra.mxu0 0.0
    %304 = vmatpush.msra.mxu0 0.0
    %305 = vmatpush.msra.mxu0 0.0
    %306 = vmatpush.msra.mxu0 0.0
    %307 = vmatpush.msra.mxu0 0.0
    %308 = vmatpush.msra.mxu0 0.0
    %309 = vmatpush.msra.mxu0 0.0
    %310 = vmatpush.msra.mxu0 0.0
    %311 = vmatpush.msra.mxu0 0.0
    %312 = vmatpush.msra.mxu0 0.0
    %313 = vmatpush.msra.mxu0 0.0
    %314 = vmatpush.msra.mxu0 %v270
    %315 = vmatpush.msra.mxu0 %v269
    %316 = vmatpush.msra.mxu0 %v268
    %317 = vmatpush.msra.mxu0 %v267
    %318 = vmatmul.f32.gmra.mxu0 %v300
    %v319 = vpop.f32.mrf.mxu0
    %v320 = vadd.f32 %v273, %v319
    %321 = vdwg.mxu0
    %vm322 = vcmask 64512
    %v323 = vsel %vm322, %v297, -inf
    %v324 = vrot.slane %v323, 4
    %v325 = vmax.f32 %v323, %v324
    %v326 = vrot.slane %v325, 2
    %v327 = vmax.f32 %v325, %v326
    %v328 = vrot.slane %v327, 1
    %v329 = vmax.f32 %v327, %v328
    %v330 = vsel %vm322, %v320, -inf
    %v331 = vrot.slane %v330, 4
    %v332 = vmax.f32 %v330, %v331
    %v333 = vrot.slane %v332, 2
    %v334 = vmax.f32 %v332, %v333
    %v335 = vrot.slane %v334, 1
    %v336 = vmax.f32 %v334, %v335
    %v337 = vsub.f32 %v297, %v329
    %v338 = vsub.f32 %v320, %v336
    %v339 = vmul.f32 %v337, 1.442695
    %v340 = vpow.pop %v339
    %v341 = vmul.f32 %v338, 1.442695
    %v342 = vpow.pop %v341
    %v343 = vsel %vm322, %v340, 0.0
    %v344 = vrot.slane %v343, 4
    %v345 = vadd.f32 %v343, %v344
    %v346 = vrot.slane %v345, 2
    %v347 = vadd.f32 %v345, %v346
    %v348 = vrot.slane %v347, 1
    %v349 = vadd.f32 %v347, %v348
    %v350 = vsel %vm322, %v342, 0.0
    %v351 = vrot.slane %v350, 4
    %v352 = vadd.f32 %v350, %v351
    %v353 = vrot.slane %v352, 2
    %v354 = vadd.f32 %v352, %v353
    %v355 = vrot.slane %v354, 1
    %v356 = vadd.f32 %v354, %v355
    %v357 = vrcp.pop %v349
    %v358 = vrcp.pop %v356
    %v359 = vmul.f32 %v340, %v357
    %v360 = vmul.f32 %v342, %v358
    %v361 = vld [vmem:[#allocation7] sm:$0xff]
    %v362 = vld [vmem:[#allocation7 + $0x8] sm:$0xff]
    %v363 = vld [vmem:[#allocation7 + $0x10] sm:$0xff]
    %v364 = vld [vmem:[#allocation7 + $0x18] sm:$0xff]
    %v365 = vld [vmem:[#allocation8] sm:$0x1]
    %v367 = vperm.slane %v365, 0
    %369 = vmatpush.msra.mxu0 0.0
    %370 = vmatpush.msra.mxu0 0.0
    %371 = vmatpush.msra.mxu0 0.0
    %372 = vmatpush.msra.mxu0 0.0
    %373 = vmatpush.msra.mxu0 0.0
    %374 = vmatpush.msra.mxu0 0.0
    %375 = vmatpush.msra.mxu0 0.0
    %376 = vmatpush.msra.mxu0 0.0
    %377 = vmatpush.msra.mxu0 0.0
    %378 = vmatpush.msra.mxu0 0.0
    %379 = vmatpush.msra.mxu0 0.0
    %380 = vmatpush.msra.mxu0 0.0
    %381 = vmatpush.msra.mxu0 %v364
    %382 = vmatpush.msra.mxu0 %v363
    %383 = vmatpush.msra.mxu0 %v362
    %384 = vmatpush.msra.mxu0 %v361
    %385 = vmatmul.f32.gmra.mxu0 %v277
    %v386 = vpop.f32.mrf.mxu0
    %v387 = vadd.f32 %v367, %v386
    %388 = vdwg.mxu0
    %389 = vmatpush.msra.mxu0 0.0
    %390 = vmatpush.msra.mxu0 0.0
    %391 = vmatpush.msra.mxu0 0.0
    %392 = vmatpush.msra.mxu0 0.0
    %393 = vmatpush.msra.mxu0 0.0
    %394 = vmatpush.msra.mxu0 0.0
    %395 = vmatpush.msra.mxu0 0.0
    %396 = vmatpush.msra.mxu0 0.0
    %397 = vmatpush.msra.mxu0 0.0
    %398 = vmatpush.msra.mxu0 0.0
    %399 = vmatpush.msra.mxu0 0.0
    %400 = vmatpush.msra.mxu0 0.0
    %401 = vmatpush.msra.mxu0 %v364
    %402 = vmatpush.msra.mxu0 %v363
    %403 = vmatpush.msra.mxu0 %v362
    %404 = vmatpush.msra.mxu0 %v361
    %405 = vmatmul.f32.gmra.mxu0 %v300
    %v406 = vpop.f32.mrf.mxu0
    %v407 = vadd.f32 %v367, %v406
    %408 = vdwg.mxu0
    %v409 = vld [vmem:[%s6] sm:$0xff]
    %v411 = vsel %vm322, %v359, 0
    %413 = vmatpush.msra.mxu0 0.0
    %414 = vmatpush.msra.mxu0 0.0
    %415 = vmatpush.msra.mxu0 0.0
    %416 = vmatpush.msra.mxu0 0.0
    %417 = vmatpush.msra.mxu0 0.0
    %418 = vmatpush.msra.mxu0 0.0
    %419 = vmatpush.msra.mxu0 0.0
    %420 = vmatpush.msra.mxu0 0.0
    %421 = vmatpush.msra.mxu0 0.0
    %422 = vmatpush.msra.mxu0 0.0
    %423 = vmatpush.msra.mxu0 0.0
    %424 = vmatpush.msra.mxu0 0.0
    %425 = vmatpush.msra.mxu0 0.0
    %426 = vmatpush.msra.mxu0 0.0
    %427 = vmatpush.msra.mxu0 0.0
    %428 = vmatpush.msra.mxu0 %v409
    %429 = vmatmul.f32.gmra.mxu0 %v411
    %v430 = vpop.f32.mrf.mxu0
    %v431 = vadd.f32 0.0, %v430
    %432 = vdwg.mxu0
    %v434 = vsel %vm322, %v360, 0
    %436 = vmatpush.msra.mxu0 0.0
    %437 = vmatpush.msra.mxu0 0.0
    %438 = vmatpush.msra.mxu0 0.0
    %439 = vmatpush.msra.mxu0 0.0
    %440 = vmatpush.msra.mxu0 0.0
    %441 = vmatpush.msra.mxu0 0.0
    %442 = vmatpush.msra.mxu0 0.0
    %443 = vmatpush.msra.mxu0 0.0
    %444 = vmatpush.msra.mxu0 0.0
    %445 = vmatpush.msra.mxu0 0.0
    %446 = vmatpush.msra.mxu0 0.0
    %447 = vmatpush.msra.mxu0 0.0
    %448 = vmatpush.msra.mxu0 0.0
    %449 = vmatpush.msra.mxu0 0.0
    %450 = vmatpush.msra.mxu0 0.0
    %451 = vmatpush.msra.mxu0 %v409
    %452 = vmatmul.f32.gmra.mxu0 %v434
    %v453 = vpop.f32.mrf.mxu0
    %v454 = vadd.f32 0.0, %v453
    %455 = vdwg.mxu0
    %v456 = vmul.f32 %v431, %v387
    %v457 = vmul.f32 %v454, %v407
    %v458 = vsel %vm275, %v456, 0.0
    %v459 = vrot.slane %v458, 4
    %v460 = vadd.f32 %v458, %v459
    %v461 = vrot.slane %v460, 2
    %v462 = vadd.f32 %v460, %v461
    %v463 = vrot.slane %v462, 1
    %v464 = vadd.f32 %v462, %v463
    %v465 = vsel %vm275, %v457, 0.0
    %v466 = vrot.slane %v465, 4
    %v467 = vadd.f32 %v465, %v466
    %v468 = vrot.slane %v467, 2
    %v469 = vadd.f32 %v467, %v468
    %v470 = vrot.slane %v469, 1
    %v471 = vadd.f32 %v469, %v470
    %v472 = vld [vmem:[#allocation10] sm:$0xff]
    %v473 = vld [vmem:[#allocation10 + $0x8] sm:$0xff]
    %v474 = vld [vmem:[#allocation10 + $0x10] sm:$0xff]
    %v475 = vld [vmem:[#allocation10 + $0x18] sm:$0xff]
    %v476 = vld [vmem:[#allocation11] sm:$0x1]
    %v478 = vperm.slane %v476, 0
    %vm482 = vcmask 1041409
    %v483 = vsel %vm482, %v471, %v464
    %v484 = vsel %vm275, %v483, 0
    %486 = vmatpush.msra.mxu0 0.0
    %487 = vmatpush.msra.mxu0 0.0
    %488 = vmatpush.msra.mxu0 0.0
    %489 = vmatpush.msra.mxu0 0.0
    %490 = vmatpush.msra.mxu0 0.0
    %491 = vmatpush.msra.mxu0 0.0
    %492 = vmatpush.msra.mxu0 0.0
    %493 = vmatpush.msra.mxu0 0.0
    %494 = vmatpush.msra.mxu0 0.0
    %495 = vmatpush.msra.mxu0 0.0
    %496 = vmatpush.msra.mxu0 0.0
    %497 = vmatpush.msra.mxu0 0.0
    %498 = vmatpush.msra.mxu0 %v475
    %499 = vmatpush.msra.mxu0 %v474
    %500 = vmatpush.msra.mxu0 %v473
    %501 = vmatpush.msra.mxu0 %v472
    %502 = vmatmul.f32.gmra.mxu0 %v484
    %v503 = vpop.f32.mrf.mxu0
    %v504 = vadd.f32 %v478, %v503
    %505 = vdwg.mxu0
    %v506 = vld [vmem:[%s9] sm:$0xff]
    %v507 = vld [vmem:[%s9 + $0x8] sm:$0xff]
    %v508 = vld [vmem:[%s9 + $0x10] sm:$0xff]
    %v509 = vld [vmem:[%s9 + $0x18] sm:$0xff]
    %v510 = vld [vmem:[#allocation13] sm:$0x1]
    %v512 = vperm.slane %v510, 0
    %v515 = vsel %vm275, %v265, 0
    %517 = vmatpush.msra.mxu0 0.0
    %518 = vmatpush.msra.mxu0 0.0
    %519 = vmatpush.msra.mxu0 0.0
    %520 = vmatpush.msra.mxu0 0.0
    %521 = vmatpush.msra.mxu0 0.0
    %522 = vmatpush.msra.mxu0 0.0
    %523 = vmatpush.msra.mxu0 0.0
    %524 = vmatpush.msra.mxu0 0.0
    %525 = vmatpush.msra.mxu0 0.0
    %526 = vmatpush.msra.mxu0 0.0
    %527 = vmatpush.msra.mxu0 0.0
    %528 = vmatpush.msra.mxu0 0.0
    %529 = vmatpush.msra.mxu0 %v509
    %530 = vmatpush.msra.mxu0 %v508
    %531 = vmatpush.msra.mxu0 %v507
    %532 = vmatpush.msra.mxu0 %v506
    %533 = vmatmul.f32.gmra.mxu0 %v515
    %v534 = vpop.f32.mrf.mxu0
    %v535 = vadd.f32 %v512, %v534
    %536 = vdwg.mxu0
    %v538 = vsel %vm275, %v266, 0
    %540 = vmatpush.msra.mxu0 0.0
    %541 = vmatpush.msra.mxu0 0.0
    %542 = vmatpush.msra.mxu0 0.0
    %543 = vmatpush.msra.mxu0 0.0
    %544 = vmatpush.msra.mxu0 0.0
    %545 = vmatpush.msra.mxu0 0.0
    %546 = vmatpush.msra.mxu0 0.0
    %547 = vmatpush.msra.mxu0 0.0
    %548 = vmatpush.msra.mxu0 0.0
    %549 = vmatpush.msra.mxu0 0.0
    %550 = vmatpush.msra.mxu0 0.0
    %551 = vmatpush.msra.mxu0 0.0
    %552 = vmatpush.msra.mxu0 %v509
    %553 = vmatpush.msra.mxu0 %v508
    %554 = vmatpush.msra.mxu0 %v507
    %555 = vmatpush.msra.mxu0 %v506
    %556 = vmatmul.f32.gmra.mxu0 %v538
    %v557 = vpop.f32.mrf.mxu0
    %v558 = vadd.f32 %v512, %v557
    %559 = vdwg.mxu0
    %v560 = vsel %vm322, %v535, -inf
    %v561 = vrot.slane %v560, 4
    %v562 = vmax.f32 %v560, %v561
    %v563 = vrot.slane %v562, 2
    %v564 = vmax.f32 %v562, %v563
    %v565 = vrot.slane %v564, 1
    %v566 = vmax.f32 %v564, %v565
    %v567 = vsel %vm322, %v558, -inf
    %v568 = vrot.slane %v567, 4
    %v569 = vmax.f32 %v567, %v568
    %v570 = vrot.slane %v569, 2
    %v571 = vmax.f32 %v569, %v570
    %v572 = vrot.slane %v571, 1
    %v573 = vmax.f32 %v571, %v572
    %v574 = vsub.f32 %v535, %v566
    %v575 = vsub.f32 %v558, %v573
    %v576 = vmul.f32 %v574, 1.442695
    %v577 = vpow.pop %v576
    %v578 = vmul.f32 %v575, 1.442695
    %v579 = vpow.pop %v578
    %v580 = vsel %vm322, %v577, 0.0
    %v581 = vrot.slane %v580, 4
    %v582 = vadd.f32 %v580, %v581
    %v583 = vrot.slane %v582, 2
    %v584 = vadd.f32 %v582, %v583
    %v585 = vrot.slane %v584, 1
    %v586 = vadd.f32 %v584, %v585
    %v587 = vsel %vm322, %v579, 0.0
    %v588 = vrot.slane %v587, 4
    %v589 = vadd.f32 %v587, %v588
    %v590 = vrot.slane %v589, 2
    %v591 = vadd.f32 %v589, %v590
    %v592 = vrot.slane %v591, 1
    %v593 = vadd.f32 %v591, %v592
    %v594 = vrcp.pop %v586
    %v595 = vrcp.pop %v593
    %v596 = vmul.f32 %v577, %v594
    %v597 = vmul.f32 %v579, %v595
    %v598 = vld [vmem:[#allocation14] sm:$0xff]
    %v599 = vld [vmem:[#allocation14 + $0x8] sm:$0xff]
    %v600 = vld [vmem:[#allocation14 + $0x10] sm:$0xff]
    %v601 = vld [vmem:[#allocation14 + $0x18] sm:$0xff]
    %v602 = vld [vmem:[#allocation16] sm:$0x1]
    %v604 = vperm.slane %v602, 0
    %606 = vmatpush.msra.mxu0 0.0
    %607 = vmatpush.msra.mxu0 0.0
    %608 = vmatpush.msra.mxu0 0.0
    %609 = vmatpush.msra.mxu0 0.0
    %610 = vmatpush.msra.mxu0 0.0
    %611 = vmatpush.msra.mxu0 0.0
    %612 = vmatpush.msra.mxu0 0.0
    %613 = vmatpush.msra.mxu0 0.0
    %614 = vmatpush.msra.mxu0 0.0
    %615 = vmatpush.msra.mxu0 0.0
    %616 = vmatpush.msra.mxu0 0.0
    %617 = vmatpush.msra.mxu0 0.0
    %618 = vmatpush.msra.mxu0 %v601
    %619 = vmatpush.msra.mxu0 %v600
    %620 = vmatpush.msra.mxu0 %v599
    %621 = vmatpush.msra.mxu0 %v598
    %622 = vmatmul.f32.gmra.mxu0 %v515
    %v623 = vpop.f32.mrf.mxu0
    %v624 = vadd.f32 %v604, %v623
    %625 = vdwg.mxu0
    %626 = vmatpush.msra.mxu0 0.0
    %627 = vmatpush.msra.mxu0 0.0
    %628 = vmatpush.msra.mxu0 0.0
    %629 = vmatpush.msra.mxu0 0.0
    %630 = vmatpush.msra.mxu0 0.0
    %631 = vmatpush.msra.mxu0 0.0
    %632 = vmatpush.msra.mxu0 0.0
    %633 = vmatpush.msra.mxu0 0.0
    %634 = vmatpush.msra.mxu0 0.0
    %635 = vmatpush.msra.mxu0 0.0
    %636 = vmatpush.msra.mxu0 0.0
    %637 = vmatpush.msra.mxu0 0.0
    %638 = vmatpush.msra.mxu0 %v601
    %639 = vmatpush.msra.mxu0 %v600
    %640 = vmatpush.msra.mxu0 %v599
    %641 = vmatpush.msra.mxu0 %v598
    %642 = vmatmul.f32.gmra.mxu0 %v538
    %v643 = vpop.f32.mrf.mxu0
    %v644 = vadd.f32 %v604, %v643
    %645 = vdwg.mxu0
    %v646 = vld [vmem:[%s13] sm:$0xff]
    %v648 = vsel %vm322, %v596, 0
    %650 = vmatpush.msra.mxu0 0.0
    %651 = vmatpush.msra.mxu0 0.0
    %652 = vmatpush.msra.mxu0 0.0
    %653 = vmatpush.msra.mxu0 0.0
    %654 = vmatpush.msra.mxu0 0.0
    %655 = vmatpush.msra.mxu0 0.0
    %656 = vmatpush.msra.mxu0 0.0
    %657 = vmatpush.msra.mxu0 0.0
    %658 = vmatpush.msra.mxu0 0.0
    %659 = vmatpush.msra.mxu0 0.0
    %660 = vmatpush.msra.mxu0 0.0
    %661 = vmatpush.msra.mxu0 0.0
    %662 = vmatpush.msra.mxu0 0.0
    %663 = vmatpush.msra.mxu0 0.0
    %664 = vmatpush.msra.mxu0 0.0
    %665 = vmatpush.msra.mxu0 %v646
    %666 = vmatmul.f32.gmra.mxu0 %v648
    %v667 = vpop.f32.mrf.mxu0
    %v668 = vadd.f32 0.0, %v667
    %669 = vdwg.mxu0
    %v671 = vsel %vm322, %v597, 0
    %673 = vmatpush.msra.mxu0 0.0
    %674 = vmatpush.msra.mxu0 0.0
    %675 = vmatpush.msra.mxu0 0.0
    %676 = vmatpush.msra.mxu0 0.0
    %677 = vmatpush.msra.mxu0 0.0
    %678 = vmatpush.msra.mxu0 0.0
    %679 = vmatpush.msra.mxu0 0.0
    %680 = vmatpush.msra.mxu0 0.0
    %681 = vmatpush.msra.mxu0 0.0
    %682 = vmatpush.msra.mxu0 0.0
    %683 = vmatpush.msra.mxu0 0.0
    %684 = vmatpush.msra.mxu0 0.0
    %685 = vmatpush.msra.mxu0 0.0
    %686 = vmatpush.msra.mxu0 0.0
    %687 = vmatpush.msra.mxu0 0.0
    %688 = vmatpush.msra.mxu0 %v646
    %689 = vmatmul.f32.gmra.mxu0 %v671
    %v690 = vpop.f32.mrf.mxu0
    %v691 = vadd.f32 0.0, %v690
    %692 = vdwg.mxu0
    %v693 = vmul.f32 %v668, %v624
    %v694 = vmul.f32 %v691, %v644
    %v695 = vsel %vm275, %v693, 0.0
    %v696 = vrot.slane %v695, 4
    %v697 = vadd.f32 %v695, %v696
    %v698 = vrot.slane %v697, 2
    %v699 = vadd.f32 %v697, %v698
    %v700 = vrot.slane %v699, 1
    %v701 = vadd.f32 %v699, %v700
    %v702 = vsel %vm275, %v694, 0.0
    %v703 = vrot.slane %v702, 4
    %v704 = vadd.f32 %v702, %v703
    %v705 = vrot.slane %v704, 2
    %v706 = vadd.f32 %v704, %v705
    %v707 = vrot.slane %v706, 1
    %v708 = vadd.f32 %v706, %v707
    %v709 = vld [vmem:[#allocation17] sm:$0xff]
    %v710 = vld [vmem:[#allocation17 + $0x8] sm:$0xff]
    %v711 = vld [vmem:[#allocation17 + $0x10] sm:$0xff]
    %v712 = vld [vmem:[#allocation17 + $0x18] sm:$0xff]
    %v713 = vld [vmem:[#allocation19] sm:$0x1]
    %v715 = vperm.slane %v713, 0
    %v719 = vsel %vm482, %v708, %v701
    %v720 = vsel %vm275, %v719, 0
    %722 = vmatpush.msra.mxu0 0.0
    %723 = vmatpush.msra.mxu0 0.0
    %724 = vmatpush.msra.mxu0 0.0
    %725 = vmatpush.msra.mxu0 0.0
    %726 = vmatpush.msra.mxu0 0.0
    %727 = vmatpush.msra.mxu0 0.0
    %728 = vmatpush.msra.mxu0 0.0
    %729 = vmatpush.msra.mxu0 0.0
    %730 = vmatpush.msra.mxu0 0.0
    %731 = vmatpush.msra.mxu0 0.0
    %732 = vmatpush.msra.mxu0 0.0
    %733 = vmatpush.msra.mxu0 0.0
    %734 = vmatpush.msra.mxu0 %v712
    %735 = vmatpush.msra.mxu0 %v711
    %736 = vmatpush.msra.mxu0 %v710
    %737 = vmatpush.msra.mxu0 %v709
    %738 = vmatmul.f32.gmra.mxu0 %v720
    %v739 = vpop.f32.mrf.mxu0
    %v740 = vadd.f32 %v715, %v739
    %741 = vdwg.mxu0
    %743 = vrot.lane.b32.xlu0 %v740, 32
    %v744 = vpop.permute.xlu0 %743
    %v746 = vsel %vm275, %v504, %v744
    %v748 = vrot.slane %v746, 1
    %v749 = vperm.slane %v746, 0
    %v750 = vperm.slane %v748, 0
    %v751 = vld [vmem:[%s16] sm:$0xff]
    %v752 = vld [vmem:[%s16 + $0x8] sm:$0xff]
    %v753 = vld [vmem:[%s16 + $0x10] sm:$0xff]
    %v754 = vld [vmem:[%s16 + $0x18] sm:$0xff]
    %v755 = vld [vmem:[%s16 + $0x20] sm:$0xff]
    %v756 = vld [vmem:[%s16 + $0x28] sm:$0xff]
    %v757 = vld [vmem:[%s16 + $0x30] sm:$0xff]
    %v758 = vld [vmem:[%s16 + $0x38] sm:$0xff]
    %v759 = vld [vmem:[#allocation20] sm:$0x1]
    %v761 = vperm.slane %v759, 0
    %vm763 = vcmask 523264
    %v764 = vsel %vm763, %v749, 0
    %766 = vmatpush.msra.mxu0 0.0
    %767 = vmatpush.msra.mxu0 0.0
    %768 = vmatpush.msra.mxu0 0.0
    %769 = vmatpush.msra.mxu0 0.0
    %770 = vmatpush.msra.mxu0 0.0
    %771 = vmatpush.msra.mxu0 0.0
    %772 = vmatpush.msra.mxu0 0.0
    %773 = vmatpush.msra.mxu0 0.0
    %774 = vmatpush.msra.mxu0 %v758
    %775 = vmatpush.msra.mxu0 %v757
    %776 = vmatpush.msra.mxu0 %v756
    %777 = vmatpush.msra.mxu0 %v755
    %778 = vmatpush.msra.mxu0 %v754
    %779 = vmatpush.msra.mxu0 %v753
    %780 = vmatpush.msra.mxu0 %v752
    %781 = vmatpush.msra.mxu0 %v751
    %782 = vmatmul.f32.gmra.mxu0 %v764
    %v783 = vpop.f32.mrf.mxu0
    %v784 = vadd.f32 %v761, %v783
    %785 = vdwg.mxu0
    %v786 = vsel %vm763, %v750, 0
    %788 = vmatpush.msra.mxu0 0.0
    %789 = vmatpush.msra.mxu0 0.0
    %790 = vmatpush.msra.mxu0 0.0
    %791 = vmatpush.msra.mxu0 0.0
    %792 = vmatpush.msra.mxu0 0.0
    %793 = vmatpush.msra.mxu0 0.0
    %794 = vmatpush.msra.mxu0 0.0
    %795 = vmatpush.msra.mxu0 0.0
    %796 = vmatpush.msra.mxu0 %v758
    %797 = vmatpush.msra.mxu0 %v757
    %798 = vmatpush.msra.mxu0 %v756
    %799 = vmatpush.msra.mxu0 %v755
    %800 = vmatpush.msra.mxu0 %v754
    %801 = vmatpush.msra.mxu0 %v753
    %802 = vmatpush.msra.mxu0 %v752
    %803 = vmatpush.msra.mxu0 %v751
    %804 = vmatmul.f32.gmra.mxu0 %v786
    %v805 = vpop.f32.mrf.mxu0
    %v806 = vadd.f32 %v761, %v805
    %807 = vdwg.mxu0
    %v808 = vsel %vm322, %v784, -inf
    %v809 = vrot.slane %v808, 4
    %v810 = vmax.f32 %v808, %v809
    %v811 = vrot.slane %v810, 2
    %v812 = vmax.f32 %v810, %v811
    %v813 = vrot.slane %v812, 1
    %v814 = vmax.f32 %v812, %v813
    %v815 = vsel %vm322, %v806, -inf
    %v816 = vrot.slane %v815, 4
    %v817 = vmax.f32 %v815, %v816
    %v818 = vrot.slane %v817, 2
    %v819 = vmax.f32 %v817, %v818
    %v820 = vrot.slane %v819, 1
    %v821 = vmax.f32 %v819, %v820
    %v822 = vsub.f32 %v784, %v814
    %v823 = vsub.f32 %v806, %v821
    %v824 = vmul.f32 %v822, 1.442695
    %v825 = vpow.pop %v824
    %v826 = vmul.f32 %v823, 1.442695
    %v827 = vpow.pop %v826
    %v828 = vsel %vm322, %v825, 0.0
    %v829 = vrot.slane %v828, 4
    %v830 = vadd.f32 %v828, %v829
    %v831 = vrot.slane %v830, 2
    %v832 = vadd.f32 %v830, %v831
    %v833 = vrot.slane %v832, 1
    %v834 = vadd.f32 %v832, %v833
    %v835 = vsel %vm322, %v827, 0.0
    %v836 = vrot.slane %v835, 4
    %v837 = vadd.f32 %v835, %v836
    %v838 = vrot.slane %v837, 2
    %v839 = vadd.f32 %v837, %v838
    %v840 = vrot.slane %v839, 1
    %v841 = vadd.f32 %v839, %v840
    %v842 = vrcp.pop %v834
    %v843 = vrcp.pop %v841
    %v844 = vmul.f32 %v825, %v842
    %v845 = vmul.f32 %v827, %v843
    %v846 = vld [vmem:[%s18] sm:$0xff]
    %v847 = vld [vmem:[%s18 + $0x8] sm:$0xff]
    %v848 = vld [vmem:[%s18 + $0x10] sm:$0xff]
    %v849 = vld [vmem:[%s18 + $0x18] sm:$0xff]
    %v850 = vld [vmem:[%s18 + $0x20] sm:$0xff]
    %v851 = vld [vmem:[%s18 + $0x28] sm:$0xff]
    %v852 = vld [vmem:[%s18 + $0x30] sm:$0xff]
    %v853 = vld [vmem:[%s18 + $0x38] sm:$0xff]
    %v854 = vld [vmem:[#allocation22] sm:$0x1]
    %v856 = vperm.slane %v854, 0
    %858 = vmatpush.msra.mxu0 0.0
    %859 = vmatpush.msra.mxu0 0.0
    %860 = vmatpush.msra.mxu0 0.0
    %861 = vmatpush.msra.mxu0 0.0
    %862 = vmatpush.msra.mxu0 0.0
    %863 = vmatpush.msra.mxu0 0.0
    %864 = vmatpush.msra.mxu0 0.0
    %865 = vmatpush.msra.mxu0 0.0
    %866 = vmatpush.msra.mxu0 %v853
    %867 = vmatpush.msra.mxu0 %v852
    %868 = vmatpush.msra.mxu0 %v851
    %869 = vmatpush.msra.mxu0 %v850
    %870 = vmatpush.msra.mxu0 %v849
    %871 = vmatpush.msra.mxu0 %v848
    %872 = vmatpush.msra.mxu0 %v847
    %873 = vmatpush.msra.mxu0 %v846
    %874 = vmatmul.f32.gmra.mxu0 %v764
    %v875 = vpop.f32.mrf.mxu0
    %v876 = vadd.f32 %v856, %v875
    %877 = vdwg.mxu0
    %878 = vmatpush.msra.mxu0 0.0
    %879 = vmatpush.msra.mxu0 0.0
    %880 = vmatpush.msra.mxu0 0.0
    %881 = vmatpush.msra.mxu0 0.0
    %882 = vmatpush.msra.mxu0 0.0
    %883 = vmatpush.msra.mxu0 0.0
    %884 = vmatpush.msra.mxu0 0.0
    %885 = vmatpush.msra.mxu0 0.0
    %886 = vmatpush.msra.mxu0 %v853
    %887 = vmatpush.msra.mxu0 %v852
    %888 = vmatpush.msra.mxu0 %v851
    %889 = vmatpush.msra.mxu0 %v850
    %890 = vmatpush.msra.mxu0 %v849
    %891 = vmatpush.msra.mxu0 %v848
    %892 = vmatpush.msra.mxu0 %v847
    %893 = vmatpush.msra.mxu0 %v846
    %894 = vmatmul.f32.gmra.mxu0 %v786
    %v895 = vpop.f32.mrf.mxu0
    %v896 = vadd.f32 %v856, %v895
    %897 = vdwg.mxu0
    %v898 = vld [vmem:[%s20] sm:$0xff]
    %v900 = vsel %vm322, %v844, 0
    %902 = vmatpush.msra.mxu0 0.0
    %903 = vmatpush.msra.mxu0 0.0
    %904 = vmatpush.msra.mxu0 0.0
    %905 = vmatpush.msra.mxu0 0.0
    %906 = vmatpush.msra.mxu0 0.0
    %907 = vmatpush.msra.mxu0 0.0
    %908 = vmatpush.msra.mxu0 0.0
    %909 = vmatpush.msra.mxu0 0.0
    %910 = vmatpush.msra.mxu0 0.0
    %911 = vmatpush.msra.mxu0 0.0
    %912 = vmatpush.msra.mxu0 0.0
    %913 = vmatpush.msra.mxu0 0.0
    %914 = vmatpush.msra.mxu0 0.0
    %915 = vmatpush.msra.mxu0 0.0
    %916 = vmatpush.msra.mxu0 0.0
    %917 = vmatpush.msra.mxu0 %v898
    %918 = vmatmul.f32.gmra.mxu0 %v900
    %v919 = vpop.f32.mrf.mxu0
    %v920 = vadd.f32 0.0, %v919
    %921 = vdwg.mxu0
    %v923 = vsel %vm322, %v845, 0
    %925 = vmatpush.msra.mxu0 0.0
    %926 = vmatpush.msra.mxu0 0.0
    %927 = vmatpush.msra.mxu0 0.0
    %928 = vmatpush.msra.mxu0 0.0
    %929 = vmatpush.msra.mxu0 0.0
    %930 = vmatpush.msra.mxu0 0.0
    %931 = vmatpush.msra.mxu0 0.0
    %932 = vmatpush.msra.mxu0 0.0
    %933 = vmatpush.msra.mxu0 0.0
    %934 = vmatpush.msra.mxu0 0.0
    %935 = vmatpush.msra.mxu0 0.0
    %936 = vmatpush.msra.mxu0 0.0
    %937 = vmatpush.msra.mxu0 0.0
    %938 = vmatpush.msra.mxu0 0.0
    %939 = vmatpush.msra.mxu0 0.0
    %940 = vmatpush.msra.mxu0 %v898
    %941 = vmatmul.f32.gmra.mxu0 %v923
    %v942 = vpop.f32.mrf.mxu0
    %v943 = vadd.f32 0.0, %v942
    %944 = vdwg.mxu0
    %v945 = vmul.f32 %v920, %v876
    %v946 = vmul.f32 %v943, %v896
    %v947 = vsel %vm763, %v945, 0.0
    %v948 = vrot.slane %v947, 4
    %v949 = vadd.f32 %v947, %v948
    %v950 = vrot.slane %v949, 2
    %v951 = vadd.f32 %v949, %v950
    %v952 = vrot.slane %v951, 1
    %v953 = vadd.f32 %v951, %v952
    %v954 = vsel %vm763, %v946, 0.0
    %v955 = vrot.slane %v954, 4
    %v956 = vadd.f32 %v954, %v955
    %v957 = vrot.slane %v956, 2
    %v958 = vadd.f32 %v956, %v957
    %v959 = vrot.slane %v958, 1
    %v960 = vadd.f32 %v958, %v959
    %v961 = vld [vmem:[%s21] sm:$0xff]
    %v962 = vld [vmem:[%s21 + $0x8] sm:$0xff]
    %v963 = vld [vmem:[%s21 + $0x10] sm:$0xff]
    %v964 = vld [vmem:[%s21 + $0x18] sm:$0xff]
    %v965 = vld [vmem:[%s21 + $0x20] sm:$0xff]
    %v966 = vld [vmem:[%s21 + $0x28] sm:$0xff]
    %v967 = vld [vmem:[%s21 + $0x30] sm:$0xff]
    %v968 = vld [vmem:[%s21 + $0x38] sm:$0xff]
    %v969 = vld [vmem:[%s22] sm:$0x1]
    %v971 = vperm.slane %v969, 0
    %v975 = vsel %vm482, %v960, %v953
    %v976 = vsel %vm763, %v975, 0
    %978 = vmatpush.msra.mxu0 0.0
    %979 = vmatpush.msra.mxu0 0.0
    %980 = vmatpush.msra.mxu0 0.0
    %981 = vmatpush.msra.mxu0 0.0
    %982 = vmatpush.msra.mxu0 0.0
    %983 = vmatpush.msra.mxu0 0.0
    %984 = vmatpush.msra.mxu0 0.0
    %985 = vmatpush.msra.mxu0 0.0
    %986 = vmatpush.msra.mxu0 %v968
    %987 = vmatpush.msra.mxu0 %v967
    %988 = vmatpush.msra.mxu0 %v966
    %989 = vmatpush.msra.mxu0 %v965
    %990 = vmatpush.msra.mxu0 %v964
    %991 = vmatpush.msra.mxu0 %v963
    %992 = vmatpush.msra.mxu0 %v962
    %993 = vmatpush.msra.mxu0 %v961
    %994 = vmatmul.f32.gmra.mxu0 %v976
    %v995 = vpop.f32.mrf.mxu0
    %v996 = vadd.f32 %v971, %v995
    %997 = vdwg.mxu0
    %999 = vrot.lane.b32.xlu0 %v996, 64
    %v1000 = vpop.permute.xlu0 %999
    %v1002 = vsel %vm763, %v996, %v1000
    %v1004 = vrot.slane %v1002, 6
    %v1005 = vrot.slane %v1002, 4
    %v1006 = vrot.slane %v1002, 2
    %vm1007 = vcmask 1041408
    %v1008 = vsel %vm1007, %v1002, %v1004
    %vm1009 = vcmask 1045508
    %v1010 = vsel %vm1009, %v1005, %v1006
    %vm1011 = vcmask 1043456
    %v1012 = vsel %vm1011, %v1008, %v1010
    %1014 = vst [vmem:[#allocation23] sm:$0xff] %v1012
    // Predicated region
    $region146: #{tpu_custom_call.1} parent=1 // pred_check
      _
    $region147: #{tpu_custom_call.1} parent=1 // pred_check_branch
      %1016 = sbr.rel (0) target = $region149
    $region148: #{tpu_custom_call.1} parent=1 // pred_region
      %1018 = vsyncadd [#allocation4], 0
      %s1020 = sshll.u32 [#allocation23], 4
      %s1021 = int_to_ptr.vmem [resolvable:$true] %s1020
      %s1022 = sshll.u32 %s23, 4
      %s1023 = int_to_ptr.hbm [resolvable:$true] %s1022
      %1025 = dma.vmem_to_hbm [thread:$0]  %s1021, 128, %s1023, [#allocation4]
    $region149: #{tpu_custom_call.1} parent=1 // pred_fallthru
      _
    // Predicated region
    $region150: #{tpu_custom_call.1} parent=1 // pred_check
      _
    $region151: #{tpu_custom_call.1} parent=1 // pred_check_branch
      %1027 = sbr.rel (0) target = $region153
    $region152: #{tpu_custom_call.1} parent=1 // pred_region
      %1029 = dma.done [#allocation4], 128
    $region153: #{tpu_custom_call.1} parent=1 // pred_fallthru
      _
    %1030 = vsyncpa [#allocation3], 1
    %1031 = vsyncpa [#allocation6], 1
    %1032 = vsyncpa [#allocation9], 1
    %1033 = vsyncpa [#allocation12], 1
    %1034 = vsyncpa [#allocation15], 1
    %1035 = vsyncpa [#allocation18], 1
    %1036 = vsyncpa [#allocation21], 1
    %1037 = vsyncpa [#allocation4], 1

</llo_original>
